<compile_context>
chip_gen: v7x
topology: tpu7x:2x2x1
jax: 0.10.0
libtpu: 0.0.40
codegen_flags: <defaults>
</compile_context>

<pallas_src>
import functools

import jax
import jax.numpy as jnp
from jax.experimental import pallas as pl
from jax.experimental.pallas import tpu as pltpu

BN_EPS = 1e-5   # nn.BatchNorm1d default
LANE = 128      # TPU lane width
SUBLANE = 8     # f32 sublane packing


def _round_up(n, m):
    return ((n + m - 1) // m) * m


def _actor_kernel(x_ref, wb_ref, p_ref, out_ref):
    """One grid step = one independent batch.

    x_ref  : (1, B, S_pad)      f32   per-step state tile (streamed)
    wb_ref : (2, P, P)          bf16  [w1, wo]            (VMEM-resident)
    p_ref  : (8 + S_pad, P)     f32   rows 0..4 = b0, gamma, beta, b1, bo;
                                      rows 8.. = w0 (kept f32: feeds BatchNorm)
    out_ref: (1, B, P)          f32   lane-dense padded output tile
    """
    x = x_ref[0]                          # (B, S_pad) f32
    s_pad = x.shape[-1]

    b0    = p_ref[0:1, :]
    gamma = p_ref[1:2, :]
    beta  = p_ref[2:3, :]
    b1    = p_ref[3:4, :]
    bo    = p_ref[4:5, :]
    w0    = p_ref[8:8 + s_pad, :]         # (S_pad, P) f32, static slice

    # Input linear + ReLU (f32: BN-sensitive path, tiny contraction dim).
    h = jnp.dot(x, w0, preferred_element_type=jnp.float32) + b0
    h = jnp.maximum(h, 0.0)

    # BatchNorm1d, training mode (biased full-batch stats), single reduction
    # pass: var = E[h^2] - mu^2 (clamped).  Padded columns are all-zero, so
    # mu = var = 0 and gamma/beta padding keeps them exactly zero.
    mu = jnp.mean(h, axis=0, keepdims=True)
    ms = jnp.mean(h * h, axis=0, keepdims=True)
    var = jnp.maximum(ms - mu * mu, 0.0)
    h = (h - mu) * jax.lax.rsqrt(var + BN_EPS) * gamma + beta

    # Hidden linear + ReLU (bf16 operands, f32 accumulation).
    h = jnp.dot(h.astype(jnp.bfloat16), wb_ref[0],
                preferred_element_type=jnp.float32) + b1
    h = jnp.maximum(h, 0.0)

    # Output linear + tanh (lane-dense (B, P) store; real cols sliced outside).
    o = jnp.dot(h.astype(jnp.bfloat16), wb_ref[1],
                preferred_element_type=jnp.float32) + bo
    out_ref[0] = jnp.tanh(o)


def pack_params(params):
    """One-time packing (amortized over all forward calls):
       * w1, wo -> (2, P, P) bf16 slab (P = feature dims rounded up to 128)
       * b0, gamma, beta, b1, bo, w0 -> (8 + S_pad, P) f32 slab."""
    w0, w1, wo = params["w0"], params["w1"], params["wo"]
    state_size, h0 = w0.shape
    h1 = w1.shape[1]
    action_size = wo.shape[1]
    P = max(_round_up(d, LANE) for d in (h0, h1, action_size))
    s_pad = _round_up(state_size, SUBLANE)

    def pad2(w, rows, cols):
        return jnp.pad(w, ((0, rows - w.shape[0]), (0, cols - w.shape[1])))

    wb_slab = jnp.stack([pad2(w1, P, P), pad2(wo, P, P)]).astype(jnp.bfloat16)

    def pad_row(v):                       # v is (1, n)
        return jnp.pad(v[0], (0, P - v.shape[1]))

    rows = [pad_row(params[k]) for k in ("b0", "gamma", "beta", "b1", "bo")]
    rows += [jnp.zeros((P,), jnp.float32)] * 3          # align w0 to sublane row 8
    p_slab = jnp.concatenate([jnp.stack(rows), pad2(w0, s_pad, P)],
                             axis=0).astype(jnp.float32)  # (8 + S_pad, P)

    return {"wb": wb_slab, "p": p_slab,
            "state_size": state_size, "action_size": action_size,
            "s_pad": s_pad}


@functools.partial(jax.jit, static_argnames=("action_size",))
def _forward_packed(states, wb_slab, p_slab, action_size):
    """states: (n_steps, B, S_pad) f32 -> (n_steps, B, action_size) f32."""
    n_steps, B, s_pad = states.shape
    P = wb_slab.shape[-1]
    p_rows = p_slab.shape[0]
    assert p_rows == 8 + s_pad

    # Explicit VMEM budget (scale-up guard, esp. v7x's 64 MiB physical VMEM).
    w_bytes = 2 * P * P * 2
    p_bytes = p_rows * P * 4
    io_bytes = 2 * 2 * (B * s_pad + B * P) * 4          # double-buffered tiles
    vmem_limit = int(min(max(4 * (w_bytes + p_bytes + io_bytes), 16 << 20),
                         64 << 20))

    flops_per_step = 2 * B * P * (s_pad + 2 * P) + 14 * B * P
    out_pad = pl.pallas_call(
        _actor_kernel,
        out_shape=jax.ShapeDtypeStruct((n_steps, B, P), jnp.float32),
        grid=(n_steps,),
        in_specs=[
            pl.BlockSpec((1, B, s_pad), lambda s: (s, 0, 0)),   # streamed state
            pl.BlockSpec((2, P, P), lambda s: (0, 0, 0)),       # resident bf16 weights
            pl.BlockSpec((p_rows, P), lambda s: (0, 0)),        # resident f32 params
        ],
        out_specs=pl.BlockSpec((1, B, P), lambda s: (s, 0, 0)),
        compiler_params=pltpu.CompilerParams(
            dimension_semantics=("parallel",),                  # v7x: 2 TCs split steps
            vmem_limit_bytes=vmem_limit),
        cost_estimate=pl.CostEstimate(
            flops=n_steps * flops_per_step,
            transcendentals=n_steps * (B * P + P),
            bytes_accessed=n_steps * 4 * (B * s_pad + B * P) + w_bytes + p_bytes),
    )(states, wb_slab, p_slab)
    return out_pad[..., :action_size]


def actor_forward(state, packed):
    """state: (S, B, state_size) stacked independent batches, (B, state_size),
    or (state_size,).  packed: from pack_params."""
    x = jnp.asarray(state, jnp.float32)
    ndim = x.ndim
    if ndim == 1:
        # mirrors `if state.dim() == 1: unsqueeze(0)`; note: PyTorch BatchNorm1d
        # raises on batch=1 in train mode, so callers should not rely on this.
        x = x[None, None, :]
    elif ndim == 2:
        x = x[None]
    s = x.shape[-1]
    s_pad = _round_up(s, SUBLANE)
    if s_pad != s:                                  # no-op (no XLA pad) when aligned
        x = jnp.pad(x, ((0, 0), (0, 0), (0, s_pad - s)))
    out = _forward_packed(x, packed["wb"], packed["p"],
                          action_size=packed["action_size"])
    return out[0] if ndim <= 2 else out


def init_params(key, state_size, action_size, hidden_units):
    """Deterministic synthetic init (fan-in uniform, like typical reset_parameters)."""
    assert len(hidden_units) == 2, "this script instantiates hidden_units of length 2"
    k0, k1, k2, k3, k4, k5 = jax.random.split(key, 6)

    def lin(kw, kb, fan_in, fan_out):
        lim = 1.0 / jnp.sqrt(jnp.float32(fan_in))
        w = jax.random.uniform(kw, (fan_in, fan_out), jnp.float32, -lim, lim)
        bb = jax.random.uniform(kb, (1, fan_out), jnp.float32, -lim, lim)
        return w, bb

    w0, b0 = lin(k0, k1, state_size, hidden_units[0])
    w1, b1 = lin(k2, k3, hidden_units[0], hidden_units[1])
    wo, bo = lin(k4, k5, hidden_units[1], action_size)
    return {
        "w0": w0, "b0": b0,
        "gamma": jnp.ones((1, hidden_units[0]), jnp.float32),   # BatchNorm1d weight init
        "beta": jnp.zeros((1, hidden_units[0]), jnp.float32),   # BatchNorm1d bias init
        "w1": w1, "b1": b1,
        "wo": wo, "bo": bo,
    }


def _reference_forward(state, p):
    """Pure-JAX f32 reference of the PyTorch forward (training-mode batch norm)."""
    hp = jax.lax.Precision.HIGHEST
    x = jnp.maximum(jnp.dot(state, p["w0"], precision=hp) + p["b0"], 0.0)
    mu = jnp.mean(x, axis=0, keepdims=True)
    var = jnp.mean((x - mu) ** 2, axis=0, keepdims=True)
    x = (x - mu) / jnp.sqrt(var + BN_EPS) * p["gamma"] + p["beta"]
    x = jnp.maximum(jnp.dot(x, p["w1"], precision=hp) + p["b1"], 0.0)
    return jnp.tanh(jnp.dot(x, p["wo"], precision=hp) + p["bo"])


if __name__ == "__main__":
    key = jax.random.PRNGKey(0)
    kp, kx = jax.random.split(key)

    n_steps, batch, state_size, action_size = 4, 8, 16, 4
    hidden_units = [32, 32]

    params = init_params(kp, state_size, action_size, hidden_units)
    packed = pack_params(params)        # one-time: 9 tensors -> 2 VMEM-resident slabs
    # Stacked independent batches (e.g. a rollout): one launch, weights DMA'd once.
    states = jax.random.normal(kx, (n_steps, batch, state_size), jnp.float32)

    out = jax.block_until_ready(actor_forward(states, packed))
    assert out.shape == (n_steps, batch, action_size)

    ref = jax.vmap(lambda s: _reference_forward(s, params))(states)
    # bf16 weights on the two large layers -> tolerance relaxed vs the f32 reference.
    assert jnp.allclose(out, ref, atol=2e-2, rtol=2e-2), "mismatch vs reference (stacked)"

    # Standard single-batch call signature, matching the PyTorch module directly.
    out1 = jax.block_until_ready(actor_forward(states[0], packed))
    assert out1.shape == (batch, action_size)
    assert jnp.allclose(out1, ref[0], atol=2e-2, rtol=2e-2), "mismatch vs reference (2-D)"

    print("KERNEL_OK")
</pallas_src>

<mosaic_0001>
module attributes {stable_mosaic.version = 11 : i64} {
  func.func @_actor_kernel(%arg0: i32, %arg1: memref<1x8x16xf32, #tpu.memory_space<vmem>>, %arg2: memref<2x128x128xbf16, #tpu.memory_space<vmem>>, %arg3: memref<24x128xf32, #tpu.memory_space<vmem>>, %arg4: memref<1x8x128xf32, #tpu.memory_space<vmem>>) attributes {dimension_semantics = [#tpu.dimension_semantics<parallel>], iteration_bounds = array<i64: 4>, scalar_prefetch = 0 : i64, scratch_operands = 0 : i64, tpu.core_type = #tpu.core_type<tc>, window_params = [{transform_indices = @transform_0, window_bounds = array<i64: 1, 8, 16>}, {pipeline_mode = #tpu.pipeline_mode<synchronous>, transform_indices = @transform_1, window_bounds = array<i64: 2, 128, 128>}, {pipeline_mode = #tpu.pipeline_mode<synchronous>, transform_indices = @transform_2, window_bounds = array<i64: 24, 128>}, {transform_indices = @transform_3, window_bounds = array<i64: 1, 8, 128>}]} {
    %c0 = arith.constant 0 : index
    %c0_0 = arith.constant 0 : index
    %c0_1 = arith.constant 0 : index
    %0 = vector.load %arg1[%c0, %c0_0, %c0_1] : memref<1x8x16xf32, #tpu.memory_space<vmem>>, vector<1x8x16xf32>
    %1 = vector.shape_cast %0 : vector<1x8x16xf32> to vector<8x16xf32>
    %c0_2 = arith.constant 0 : index
    %c0_3 = arith.constant 0 : index
    %2 = vector.load %arg3[%c0_2, %c0_3] : memref<24x128xf32, #tpu.memory_space<vmem>>, vector<1x128xf32>
    %c1 = arith.constant 1 : index
    %c0_4 = arith.constant 0 : index
    %3 = vector.load %arg3[%c1, %c0_4] : memref<24x128xf32, #tpu.memory_space<vmem>>, vector<1x128xf32>
    %c2 = arith.constant 2 : index
    %c0_5 = arith.constant 0 : index
    %4 = vector.load %arg3[%c2, %c0_5] : memref<24x128xf32, #tpu.memory_space<vmem>>, vector<1x128xf32>
    %c3 = arith.constant 3 : index
    %c0_6 = arith.constant 0 : index
    %5 = vector.load %arg3[%c3, %c0_6] : memref<24x128xf32, #tpu.memory_space<vmem>>, vector<1x128xf32>
    %c4 = arith.constant 4 : index
    %c0_7 = arith.constant 0 : index
    %6 = vector.load %arg3[%c4, %c0_7] : memref<24x128xf32, #tpu.memory_space<vmem>>, vector<1x128xf32>
    %c8 = arith.constant 8 : index
    %c0_8 = arith.constant 0 : index
    %7 = vector.load %arg3[%c8, %c0_8] : memref<24x128xf32, #tpu.memory_space<vmem>>, vector<16x128xf32>
    %cst = arith.constant dense<0.000000e+00> : vector<8x128xf32>
    %8 = tpu.matmul %1, %7, %cst {dimension_numbers = #tpu.dot_dimension_numbers<[1], [0], [0], [1], [0, 0, 1, 1], [], []>} : vector<8x16xf32>, vector<16x128xf32>, vector<8x128xf32> -> vector<8x128xf32>
    %9 = vector.broadcast %2 : vector<1x128xf32> to vector<8x128xf32>
    %10 = arith.addf %8, %9 : vector<8x128xf32>
    %cst_9 = arith.constant 0.000000e+00 : f32
    %11 = vector.broadcast %cst_9 : f32 to vector<8x128xf32>
    %12 = arith.maximumf %10, %11 : vector<8x128xf32>
    %cst_10 = arith.constant dense<0.000000e+00> : vector<128xf32>
    %13 = vector.multi_reduction <add>, %12, %cst_10 [0] : vector<8x128xf32> to vector<128xf32>
    %14 = vector.shape_cast %13 : vector<128xf32> to vector<1x128xf32>
    %cst_11 = arith.constant 8.000000e+00 : f32
    %15 = vector.broadcast %cst_11 : f32 to vector<1x128xf32>
    %16 = arith.divf %14, %15 : vector<1x128xf32>
    %17 = arith.mulf %12, %12 : vector<8x128xf32>
    %cst_12 = arith.constant dense<0.000000e+00> : vector<128xf32>
    %18 = vector.multi_reduction <add>, %17, %cst_12 [0] : vector<8x128xf32> to vector<128xf32>
    %19 = vector.shape_cast %18 : vector<128xf32> to vector<1x128xf32>
    %cst_13 = arith.constant 8.000000e+00 : f32
    %20 = vector.broadcast %cst_13 : f32 to vector<1x128xf32>
    %21 = arith.divf %19, %20 : vector<1x128xf32>
    %22 = arith.mulf %16, %16 : vector<1x128xf32>
    %23 = arith.subf %21, %22 : vector<1x128xf32>
    %cst_14 = arith.constant 0.000000e+00 : f32
    %24 = vector.broadcast %cst_14 : f32 to vector<1x128xf32>
    %25 = arith.maximumf %23, %24 : vector<1x128xf32>
    %26 = vector.broadcast %16 : vector<1x128xf32> to vector<8x128xf32>
    %27 = arith.subf %12, %26 : vector<8x128xf32>
    %cst_15 = arith.constant 9.99999974E-6 : f32
    %28 = vector.broadcast %cst_15 : f32 to vector<1x128xf32>
    %29 = arith.addf %25, %28 : vector<1x128xf32>
    %30 = math.rsqrt %29 : vector<1x128xf32>
    %31 = vector.broadcast %30 : vector<1x128xf32> to vector<8x128xf32>
    %32 = arith.mulf %27, %31 : vector<8x128xf32>
    %33 = vector.broadcast %3 : vector<1x128xf32> to vector<8x128xf32>
    %34 = arith.mulf %32, %33 : vector<8x128xf32>
    %35 = vector.broadcast %4 : vector<1x128xf32> to vector<8x128xf32>
    %36 = arith.addf %34, %35 : vector<8x128xf32>
    %37 = arith.truncf %36 : vector<8x128xf32> to vector<8x128xbf16>
    %c0_16 = arith.constant 0 : index
    %c0_17 = arith.constant 0 : index
    %c0_18 = arith.constant 0 : index
    %38 = vector.load %arg2[%c0_16, %c0_17, %c0_18] : memref<2x128x128xbf16, #tpu.memory_space<vmem>>, vector<1x128x128xbf16>
    %39 = vector.shape_cast %38 : vector<1x128x128xbf16> to vector<128x128xbf16>
    %cst_19 = arith.constant dense<0.000000e+00> : vector<8x128xf32>
    %40 = tpu.matmul %37, %39, %cst_19 {dimension_numbers = #tpu.dot_dimension_numbers<[1], [0], [0], [1], [0, 0, 1, 1], [], []>} : vector<8x128xbf16>, vector<128x128xbf16>, vector<8x128xf32> -> vector<8x128xf32>
    %41 = vector.broadcast %5 : vector<1x128xf32> to vector<8x128xf32>
    %42 = arith.addf %40, %41 : vector<8x128xf32>
    %cst_20 = arith.constant 0.000000e+00 : f32
    %43 = vector.broadcast %cst_20 : f32 to vector<8x128xf32>
    %44 = arith.maximumf %42, %43 : vector<8x128xf32>
    %45 = arith.truncf %44 : vector<8x128xf32> to vector<8x128xbf16>
    %c1_21 = arith.constant 1 : index
    %c0_22 = arith.constant 0 : index
    %c0_23 = arith.constant 0 : index
    %46 = vector.load %arg2[%c1_21, %c0_22, %c0_23] : memref<2x128x128xbf16, #tpu.memory_space<vmem>>, vector<1x128x128xbf16>
    %47 = vector.shape_cast %46 : vector<1x128x128xbf16> to vector<128x128xbf16>
    %cst_24 = arith.constant dense<0.000000e+00> : vector<8x128xf32>
    %48 = tpu.matmul %45, %47, %cst_24 {dimension_numbers = #tpu.dot_dimension_numbers<[1], [0], [0], [1], [0, 0, 1, 1], [], []>} : vector<8x128xbf16>, vector<128x128xbf16>, vector<8x128xf32> -> vector<8x128xf32>
    %49 = vector.broadcast %6 : vector<1x128xf32> to vector<8x128xf32>
    %50 = arith.addf %48, %49 : vector<8x128xf32>
    %51 = math.tanh %50 : vector<8x128xf32>
    %c0_25 = arith.constant 0 : index
    %c0_26 = arith.constant 0 : index
    %c0_27 = arith.constant 0 : index
    %52 = vector.load %arg4[%c0_25, %c0_26, %c0_27] : memref<1x8x128xf32, #tpu.memory_space<vmem>>, vector<1x8x128xf32>
    %53 = vector.shape_cast %52 : vector<1x8x128xf32> to vector<8x128xf32>
    %54 = vector.shape_cast %51 : vector<8x128xf32> to vector<1x8x128xf32>
    tpu.vector_store %arg4[%c0_25, %c0_26, %c0_27], %54 {strides = array<i32>} : memref<1x8x128xf32, #tpu.memory_space<vmem>>, vector<1x8x128xf32>,
    return
  }
  func.func @transform_0(%arg0: i32) -> (i32, i32, i32) {
    %c0_i32 = arith.constant 0 : i32
    %c0_i32_0 = arith.constant 0 : i32
    %c0_i32_1 = arith.constant 0 : i32
    return %arg0, %c0_i32, %c0_i32_0 : i32, i32, i32
  }
  func.func @transform_1(%arg0: i32) -> (i32, i32, i32) {
    %c0_i32 = arith.constant 0 : i32
    %c0_i32_0 = arith.constant 0 : i32
    %c0_i32_1 = arith.constant 0 : i32
    %c0_i32_2 = arith.constant 0 : i32
    return %c0_i32, %c0_i32_0, %c0_i32_1 : i32, i32, i32
  }
  func.func @transform_2(%arg0: i32) -> (i32, i32) {
    %c0_i32 = arith.constant 0 : i32
    %c0_i32_0 = arith.constant 0 : i32
    %c0_i32_1 = arith.constant 0 : i32
    return %c0_i32, %c0_i32_0 : i32, i32
  }
  func.func @transform_3(%arg0: i32) -> (i32, i32, i32) {
    %c0_i32 = arith.constant 0 : i32
    %c0_i32_0 = arith.constant 0 : i32
    %c0_i32_1 = arith.constant 0 : i32
    return %arg0, %c0_i32, %c0_i32_0 : i32, i32, i32
  }
}

</mosaic_0001>

<llo_original>
// kernel: _forward_packed.1
$region0: #{_forward_packed.1}
  #allocation0 [shape = 'u32[]', space=smem, size = 0x4, offset = 0x4, fixed_abs, tag = 'smem constant byte address 0x4 - core index']
  #allocation1 [shape = 'u32[144,128]{1,0:T(1,128)}', space=vmem, size = 0x12000, scoped, tag = 'internal scratch']
  %s0 = inlined_call_operand.hbm [shape: f32[4,8,16], index: 0, kind: input, shape index: {}]
  %s1 = inlined_call_operand.hbm [shape: bf16[2,128,128], index: 1, kind: input, shape index: {}]
  %s2 = inlined_call_operand.hbm [shape: f32[24,128], index: 2, kind: input, shape index: {}]
  %s3 = inlined_call_operand.vmem [shape: f32[4,8,128], index: 3, kind: output, shape index: {}]
  %s4 = sld [smem:[#allocation0]]
  $region57: #{_forward_packed.1} parent=0
    _
  %s6 = ssub.s32 1, %s4
  %s7 = scalar_select 0, %s6, %s4
  $region1: #{_forward_packed.1} parent=0
    #allocation2 [shape = 'u8[8192]{0}', space=vmem, size = 0x2000, scoped, tag = 'input window, operand 0']
    #allocation3 [shape = 's32[2]{0}', space=sflag, size = 0x8, scoped, tag = 'scoped memory for _forward_packed.1']
    #allocation4 [shape = 'u8[65536]{0}', space=vmem, size = 0x10000, scoped, tag = 'input window, operand 1, single buffered']
    #allocation5 [shape = 's32[1]{0}', space=sflag, size = 0x4, scoped, tag = 'scoped memory for _forward_packed.1']
    #allocation6 [shape = 'u8[12288]{0}', space=vmem, size = 0x3000, scoped, tag = 'input window, operand 2, single buffered']
    %8 = vsyncpa [#allocation3], 0
    %s9 = scalar_lea.sflag [#allocation3], 1
    %10 = vsyncpa %s9, 0
    %11 = vsyncpa [#allocation5], 0
    loop: start=0, step=1, limit=6
    $region2: #{_forward_packed.1} parent=1 // loop_pre_header
      _
    $region3: #{_forward_packed.1} parent=1 // loop_header
      %s13 = sphi 0, %s17
      %p14 = scmp.ge.s32.totalorder %s13, 6
      %s23 = sphi 0, %s25
      %s26 = sphi 0, %s23
      %s27 = sphi 0, %s26
      %s43 = sphi 0, %s27
      %s47 = sphi 0, %s47
      %s49 = sphi 0, %s47
      %s50 = sphi 0, %s49
      %s64 = sphi 0, %s50
      %s68 = sphi 0, %s68
      %s70 = sphi 0, %s68
      %s71 = sphi 0, %s70
      %s85 = sphi 0, %s71
      %s91 = sphi 0, %s93
      %s94 = sphi 0, %s91
      %s95 = sphi 0, %s94
      %s111 = sphi 0, %s95
    $region4: #{_forward_packed.1} parent=1 // loop_header_branch
      %16 = sbr.rel (%p14) target = $region8
    $region5: #{_forward_packed.1} parent=1 // loop_body
      %s18 = ssub.s32 %s13, 1
      %s19 = ssub.s32 %s13, 2
      %s20 = sadd.s32 %s13, 1
      %s21 = ssub.s32 %s13, %s20
      %p22 = scmp.eq.s32.totalorder %s21, 0
      %s24 = sadd.s32 %s23, 1
      %s25 = scalar_select %p22, %s23, %s24
      %p28 = pneg %p22
      %p29 = scmp.eq.s32.totalorder %s13, 3
      %p30 = por %p28, %p29
      %p31 = scmp.ne.s32.totalorder %s23, %s26
      %p32 = scmp.eq.s32.totalorder %s13, 0
      %p33 = por %p31, %p32
      %p34 = scmp.ne.s32.totalorder %s23, %s26
      %p35 = scmp.eq.s32.totalorder %s18, 3
      %p36 = por %p34, %p35
      %p37 = scmp.ne.s32.totalorder %s26, %s27
      %p38 = scmp.eq.s32.totalorder %s18, 0
      %p39 = por %p37, %p38
      %p40 = scmp.ne.s32.totalorder %s26, %s27
      %p41 = scmp.eq.s32.totalorder %s19, 3
      %p42 = por %p40, %p41
      %p44 = scmp.ne.s32.totalorder %s27, %s43
      %p45 = scmp.eq.s32.totalorder %s19, 0
      %p46 = por %p44, %p45
      %s48 = sadd.s32 %s47, 1
      %p51 = scmp.eq.s32.totalorder %s13, 3
      %p52 = scmp.ne.s32.totalorder %s47, %s49
      %p53 = scmp.eq.s32.totalorder %s13, 0
      %p54 = por %p52, %p53
      %p55 = scmp.ne.s32.totalorder %s47, %s49
      %p56 = scmp.eq.s32.totalorder %s18, 3
      %p57 = por %p55, %p56
      %p58 = scmp.ne.s32.totalorder %s49, %s50
      %p59 = scmp.eq.s32.totalorder %s18, 0
      %p60 = por %p58, %p59
      %p61 = scmp.ne.s32.totalorder %s49, %s50
      %p62 = scmp.eq.s32.totalorder %s19, 3
      %p63 = por %p61, %p62
      %p65 = scmp.ne.s32.totalorder %s50, %s64
      %p66 = scmp.eq.s32.totalorder %s19, 0
      %p67 = por %p65, %p66
      %s69 = sadd.s32 %s68, 1
      %p72 = scmp.eq.s32.totalorder %s13, 3
      %p73 = scmp.ne.s32.totalorder %s68, %s70
      %p74 = scmp.eq.s32.totalorder %s13, 0
      %p75 = por %p73, %p74
      %p76 = scmp.ne.s32.totalorder %s68, %s70
      %p77 = scmp.eq.s32.totalorder %s18, 3
      %p78 = por %p76, %p77
      %p79 = scmp.ne.s32.totalorder %s70, %s71
      %p80 = scmp.eq.s32.totalorder %s18, 0
      %p81 = por %p79, %p80
      %p82 = scmp.ne.s32.totalorder %s70, %s71
      %p83 = scmp.eq.s32.totalorder %s19, 3
      %p84 = por %p82, %p83
      %p86 = scmp.ne.s32.totalorder %s71, %s85
      %p87 = scmp.eq.s32.totalorder %s19, 0
      %p88 = por %p86, %p87
      %s89 = ssub.s32 %s13, %s20
      %p90 = scmp.eq.s32.totalorder %s89, 0
      %s92 = sadd.s32 %s91, 1
      %s93 = scalar_select %p90, %s91, %s92
      %p96 = pneg %p90
      %p97 = scmp.eq.s32.totalorder %s13, 3
      %p98 = por %p96, %p97
      %p99 = scmp.ne.s32.totalorder %s91, %s94
      %p100 = scmp.eq.s32.totalorder %s13, 0
      %p101 = por %p99, %p100
      %p102 = scmp.ne.s32.totalorder %s91, %s94
      %p103 = scmp.eq.s32.totalorder %s18, 3
      %p104 = por %p102, %p103
      %p105 = scmp.ne.s32.totalorder %s94, %s95
      %p106 = scmp.eq.s32.totalorder %s18, 0
      %p107 = por %p105, %p106
      %p108 = scmp.ne.s32.totalorder %s94, %s95
      %p109 = scmp.eq.s32.totalorder %s19, 3
      %p110 = por %p108, %p109
      %p112 = scmp.ne.s32.totalorder %s95, %s111
      %p113 = scmp.eq.s32.totalorder %s19, 0
      %p114 = por %p112, %p113
      %p115 = scmp.le.s32.totalorder 1, %s13
      %p116 = scmp.lt.s32.totalorder %s13, 5
      %p117 = pnand %p115, %p116
      %p118 = pneg %p117
      // Predicated region
      $region9: #{_forward_packed.1} parent=5 // pred_check
        _
      $region10: #{_forward_packed.1} parent=5 // pred_check_branch
        %120 = sbr.rel (%p117) target = $region12
      $region11: #{_forward_packed.1} parent=5 // pred_region
        %s121 = ssub.s32 %s13, 1
        // Predicated region
        $region13: #{_forward_packed.1} parent=11 // pred_check
          %p122 = pneg %p60
        $region14: #{_forward_packed.1} parent=11 // pred_check_branch
          %124 = sbr.rel (%p122) target = $region16
        $region15: #{_forward_packed.1} parent=11 // pred_region
          %s126 = ssub.s32 2048, 2048
          %127 = vsyncadd [#allocation5], %s126
          %s128 = sshll.u32 [#allocation4], 4
          %s129 = int_to_ptr.vmem [resolvable:$true] %s128
          %134 = dma.hbm_to_vmem [thread:$0]  %s1, 2048, %s129, [#allocation5], 64, 64, 4
        $region16: #{_forward_packed.1} parent=11 // pred_fallthru
          _
        // Predicated region
        $region17: #{_forward_packed.1} parent=11 // pred_check
          %p135 = pneg %p81
        $region18: #{_forward_packed.1} parent=11 // pred_check_branch
          %137 = sbr.rel (%p135) target = $region20
        $region19: #{_forward_packed.1} parent=11 // pred_region
          %s139 = ssub.s32 384, 384
          %140 = vsyncadd [#allocation5], %s139
          %s141 = sshll.u32 [#allocation6], 4
          %s142 = int_to_ptr.vmem [resolvable:$true] %s141
          %147 = dma.hbm_to_vmem [thread:$0]  %s2, 384, %s142, [#allocation5], 128, 128, 8
        $region20: #{_forward_packed.1} parent=11 // pred_fallthru
          _
      $region12: #{_forward_packed.1} parent=5 // pred_fallthru
        _
      %p148 = scmp.lt.s32.totalorder %s13, 4
      // Predicated region
      $region21: #{_forward_packed.1} parent=5 // pred_check
        %p149 = pneg %p148
      $region22: #{_forward_packed.1} parent=5 // pred_check_branch
        %151 = sbr.rel (%p149) target = $region24
      $region23: #{_forward_packed.1} parent=5 // pred_region
        // Predicated region
        $region25: #{_forward_packed.1} parent=23 // pred_check
          %p152 = pneg %p33
        $region26: #{_forward_packed.1} parent=23 // pred_check_branch
          %154 = sbr.rel (%p152) target = $region28
        $region27: #{_forward_packed.1} parent=23 // pred_region
          %s155 = sand.u32 %s23, 1
          %s156 = scalar_lea.sflag [#allocation3], %s155
          %s157 = sand.u32 %s23, 1
          %s158 = smul.addr %s157, 8
          %s159 = scalar_lea.vmem [#allocation2], %s158
          %s161 = ssub.s32 128, 128
          %162 = vsyncadd %s156, %s161
          %s163 = smul.addr %s13, 128
          %s164 = scalar_lea.hbm %s0, %s163
          %s166 = sshll.u32 %s159, 4
          %s167 = int_to_ptr.vmem [resolvable:$true] %s166
          %169 = dma.hbm_to_vmem [thread:$0]  %s164, 128, %s167, %s156
        $region28: #{_forward_packed.1} parent=23 // pred_fallthru
          _
      $region24: #{_forward_packed.1} parent=5 // pred_fallthru
        _
      %p170 = scmp.le.s32.totalorder 1, %s13
      %p171 = scmp.lt.s32.totalorder %s13, 5
      %p172 = pnand %p170, %p171
      %p173 = pneg %p172
      // Predicated region
      $region29: #{_forward_packed.1} parent=5 // pred_check
        _
      $region30: #{_forward_packed.1} parent=5 // pred_check_branch
        %175 = sbr.rel (%p172) target = $region32
      $region31: #{_forward_packed.1} parent=5 // pred_region
        %s176 = ssub.s32 %s13, 1
        %s177 = sand.u32 %s26, 1
        %s178 = scalar_lea.sflag [#allocation3], %s177
        %s179 = sand.u32 %s26, 1
        %s180 = smul.addr %s179, 8
        %s181 = scalar_lea.vmem [#allocation2], %s180
        // Predicated region
        $region33: #{_forward_packed.1} parent=31 // pred_check
          %p182 = pneg %p39
        $region34: #{_forward_packed.1} parent=31 // pred_check_branch
          %184 = sbr.rel (%p182) target = $region36
        $region35: #{_forward_packed.1} parent=31 // pred_region
          %185 = dma.done %s178, 128
        $region36: #{_forward_packed.1} parent=31 // pred_fallthru
          _
        // Predicated region
        $region37: #{_forward_packed.1} parent=31 // pred_check
          %p186 = pneg %p60
        $region38: #{_forward_packed.1} parent=31 // pred_check_branch
          %188 = sbr.rel (%p186) target = $region40
        $region39: #{_forward_packed.1} parent=31 // pred_region
          %189 = dma.done [#allocation5], 2048
        $region40: #{_forward_packed.1} parent=31 // pred_fallthru
          _
        // Predicated region
        $region41: #{_forward_packed.1} parent=31 // pred_check
          %p190 = pneg %p81
        $region42: #{_forward_packed.1} parent=31 // pred_check_branch
          %192 = sbr.rel (%p190) target = $region44
        $region43: #{_forward_packed.1} parent=31 // pred_region
          %193 = dma.done [#allocation5], 384
        $region44: #{_forward_packed.1} parent=31 // pred_fallthru
          _
        %s194 = sand.u32 %s26, 1
        %s195 = scalar_lea.sflag [#allocation3], %s194
        %s196 = sand.u32 %s26, 1
        %s197 = smul.addr %s196, 8
        %s198 = scalar_lea.vmem [#allocation2], %s197
        %p199 = pneg %p39
        %p200 = pneg %p36
        %p201 = pneg %p60
        %p202 = pneg %p57
        %p203 = pneg %p81
        %p204 = pneg %p78
        %p205 = pneg %p107
        %p206 = pneg %p104
        %p207 = scmp.lt.s32.totalorder %s18, 3
        %s208 = scalar_select %p207, %s18, 3
        %s209 = smul.addr %s208, 8
        %s210 = scalar_lea.vmem %s3, %s209
        %p211 = scmp.lt.s32.totalorder %s18, 3
        %s212 = scalar_select %p211, %s18, 3
        %s213 = smul.addr %s212, 8
        %s214 = scalar_lea.vmem %s3, %s213
        %v216 = vld [vmem:[%s181] sm:$0xff]
        %v217 = vld [vmem:[#allocation6] sm:$0x1]
        %v218 = vld [vmem:[#allocation6 + $0x1] sm:$0x1]
        %v219 = vld [vmem:[#allocation6 + $0x2] sm:$0x1]
        %v220 = vld [vmem:[#allocation6 + $0x3] sm:$0x1]
        %v221 = vld [vmem:[#allocation6 + $0x4] sm:$0x1]
        %v222 = vld [vmem:[#allocation6 + $0x8] sm:$0xff]
        %v223 = vld [vmem:[#allocation6 + $0x10] sm:$0xff]
        %v224 = vlaneseq
        %v225 = vshrl.u32 %v224, 7
        %v226 = vsub.s32 0, %v225
        %v227 = vrot.slane %v217, %v226
        %vm228 = vcmask 130048
        %v230 = vsel %vm228, %v216, 0
        %232 = vmatprep.subr.mxu0 0.0
        %233 = vmatpush1.msra.mxu0 %v222
        %234 = vmatprep.subr.mxu0 0.0
        %235 = vmatpush1.msra.mxu0 %v223
        %236 = vmatprep.subr.mxu0 0.0
        %237 = vmatpush1.msra.mxu0 0.0
        %238 = vmatprep.subr.mxu0 0.0
        %239 = vmatpush1.msra.mxu0 0.0
        %240 = vmatprep.subr.mxu0 0.0
        %241 = vmatpush1.msra.mxu0 0.0
        %242 = vmatprep.subr.mxu0 0.0
        %243 = vmatpush1.msra.mxu0 0.0
        %244 = vmatprep.subr.mxu0 0.0
        %245 = vmatpush1.msra.mxu0 0.0
        %246 = vmatprep.subr.mxu0 0.0
        %247 = vmatpush1.msra.mxu0 0.0
        %248 = vmatprep.subr.mxu0 0.0
        %249 = vmatpush1.msra.mxu0 0.0
        %250 = vmatprep.subr.mxu0 0.0
        %251 = vmatpush1.msra.mxu0 0.0
        %252 = vmatprep.subr.mxu0 0.0
        %253 = vmatpush1.msra.mxu0 0.0
        %254 = vmatprep.subr.mxu0 0.0
        %255 = vmatpush1.msra.mxu0 0.0
        %256 = vmatprep.subr.mxu0 0.0
        %257 = vmatpush1.msra.mxu0 0.0
        %258 = vmatprep.subr.mxu0 0.0
        %259 = vmatpush1.msra.mxu0 0.0
        %260 = vmatprep.subr.mxu0 0.0
        %261 = vmatpush1.msra.mxu0 0.0
        %262 = vmatprep.subr.mxu0 0.0
        %263 = vmatpush1.msra.mxu0 0.0
        %264 = vmatprep.subr.mxu0 0.0
        %265 = vmatpush1.msra.mxu0 0.0
        %266 = vmatprep.subr.mxu0 0.0
        %267 = vmatpush1.msra.mxu0 0.0
        %268 = vmatprep.subr.mxu0 0.0
        %269 = vmatpush1.msra.mxu0 0.0
        %270 = vmatprep.subr.mxu0 0.0
        %271 = vmatpush1.msra.mxu0 0.0
        %272 = vmatprep.subr.mxu0 0.0
        %273 = vmatpush1.msra.mxu0 0.0
        %274 = vmatprep.subr.mxu0 0.0
        %275 = vmatpush1.msra.mxu0 0.0
        %276 = vmatprep.subr.mxu0 0.0
        %277 = vmatpush1.msra.mxu0 0.0
        %278 = vmatprep.subr.mxu0 0.0
        %279 = vmatpush1.msra.mxu0 0.0
        %280 = vmatprep.subr.mxu0 0.0
        %281 = vmatpush1.msra.mxu0 0.0
        %282 = vmatprep.subr.mxu0 0.0
        %283 = vmatpush1.msra.mxu0 0.0
        %284 = vmatprep.subr.mxu0 0.0
        %285 = vmatpush1.msra.mxu0 0.0
        %286 = vmatprep.subr.mxu0 0.0
        %287 = vmatpush1.msra.mxu0 0.0
        %288 = vmatprep.subr.mxu0 0.0
        %289 = vmatpush1.msra.mxu0 0.0
        %290 = vmatprep.subr.mxu0 0.0
        %291 = vmatpush1.msra.mxu0 0.0
        %292 = vmatprep.subr.mxu0 0.0
        %293 = vmatpush1.msra.mxu0 0.0
        %294 = vmatprep.subr.mxu0 0.0
        %295 = vmatpush1.msra.mxu0 0.0
        %296 = vmatprep.mubr.f32.mxu0 0.0
        %297 = vmatmul.mubr.f32.gmra.mrb[0].mxu0 %v230
        %v298 = vpop.f32.mrb[0].mxu0
        %v299 = vadd.f32 %v227, %v298
        %v300 = vpop.f32.mrb[0].mxu0
        %301 = vdwg.mxu0
        %v302 = vmax.f32 %v299, 0.0
        %v303 = vrot.slane %v302, 4
        %v304 = vadd.f32 %v302, %v303
        %v305 = vrot.slane %v304, 2
        %v306 = vadd.f32 %v304, %v305
        %v307 = vrot.slane %v306, 1
        %v308 = vadd.f32 %v306, %v307
        %v309 = vrcp.pop 8.0
        %v310 = vmul.f32 %v308, %v309
        %v311 = vmul.f32 %v302, %v302
        %v312 = vrot.slane %v311, 4
        %v313 = vadd.f32 %v311, %v312
        %v314 = vrot.slane %v313, 2
        %v315 = vadd.f32 %v313, %v314
        %v316 = vrot.slane %v315, 1
        %v317 = vadd.f32 %v315, %v316
        %v318 = vmul.f32 %v317, %v309
        %v319 = vmul.f32 %v310, %v310
        %v320 = vsub.f32 %v318, %v319
        %v321 = vmax.f32 %v320, 0.0
        %v322 = vsub.f32 %v302, %v310
        %v323 = vadd.f32 %v321, 1e-05
        %v324 = vrsqrt.pop %v323
        %v325 = vmul.f32 %v322, %v324
        %v326 = vlaneseq
        %v327 = vshrl.u32 %v326, 7
        %v328 = vsub.s32 0, %v327
        %v329 = vrot.slane %v218, %v328
        %v330 = vmul.f32 %v325, %v329
        %v331 = vlaneseq
        %v332 = vshrl.u32 %v331, 7
        %v333 = vsub.s32 0, %v332
        %v334 = vrot.slane %v219, %v333
        %v335 = vadd.f32 %v330, %v334
        %v336 = vpack.c.bf16 %v335, %v335
        %v337 = vld [vmem:[#allocation4] sm:$0xf]
        %v338 = vld [vmem:[#allocation4 + $0x4] sm:$0xf]
        %v339 = vld [vmem:[#allocation4 + $0x8] sm:$0xf]
        %v340 = vld [vmem:[#allocation4 + $0xc] sm:$0xf]
        %v341 = vld [vmem:[#allocation4 + $0x10] sm:$0xf]
        %v342 = vld [vmem:[#allocation4 + $0x14] sm:$0xf]
        %v343 = vld [vmem:[#allocation4 + $0x18] sm:$0xf]
        %v344 = vld [vmem:[#allocation4 + $0x1c] sm:$0xf]
        %v345 = vld [vmem:[#allocation4 + $0x20] sm:$0xf]
        %v346 = vld [vmem:[#allocation4 + $0x24] sm:$0xf]
        %v347 = vld [vmem:[#allocation4 + $0x28] sm:$0xf]
        %v348 = vld [vmem:[#allocation4 + $0x2c] sm:$0xf]
        %v349 = vld [vmem:[#allocation4 + $0x30] sm:$0xf]
        %v350 = vld [vmem:[#allocation4 + $0x34] sm:$0xf]
        %v351 = vld [vmem:[#allocation4 + $0x38] sm:$0xf]
        %v352 = vld [vmem:[#allocation4 + $0x3c] sm:$0xf]
        %v353 = vlaneseq
        %v354 = vshrl.u32 %v353, 7
        %v355 = vsub.s32 0, %v354
        %v356 = vrot.slane %v220, %v355
        %v373 = vunpack.c.l.b16 %v337
        %v374 = vunpack.c.l.b16 %v338
        %v375 = vunpack.c.l.b16 %v339
        %v376 = vunpack.c.l.b16 %v340
        %v377 = vunpack.c.l.b16 %v341
        %v378 = vunpack.c.l.b16 %v342
        %v379 = vunpack.c.l.b16 %v343
        %v380 = vunpack.c.l.b16 %v344
        %v381 = vunpack.c.l.b16 %v345
        %v382 = vunpack.c.l.b16 %v346
        %v383 = vunpack.c.l.b16 %v347
        %v384 = vunpack.c.l.b16 %v348
        %v385 = vunpack.c.l.b16 %v349
        %v386 = vunpack.c.l.b16 %v350
        %v387 = vunpack.c.l.b16 %v351
        %v388 = vunpack.c.l.b16 %v352
        %v389 = vpack.c.b16 %v374, %v373
        %v390 = vpack.c.b16 %v376, %v375
        %v391 = vpack.c.b16 %v378, %v377
        %v392 = vpack.c.b16 %v380, %v379
        %v393 = vpack.c.b16 %v382, %v381
        %v394 = vpack.c.b16 %v384, %v383
        %v395 = vpack.c.b16 %v386, %v385
        %v396 = vpack.c.b16 %v388, %v387
        %405 = vmatprep.subr.bf16.mxu0 0
        %406 = vmatpush1.bf16.msra.mxu0 %v389
        %407 = vmatprep.subr.bf16.mxu0 0
        %408 = vmatpush1.bf16.msra.mxu0 %v390
        %409 = vmatprep.subr.bf16.mxu0 0
        %410 = vmatpush1.bf16.msra.mxu0 %v391
        %411 = vmatprep.subr.bf16.mxu0 0
        %412 = vmatpush1.bf16.msra.mxu0 %v392
        %413 = vmatprep.subr.bf16.mxu0 0
        %414 = vmatpush1.bf16.msra.mxu0 %v393
        %415 = vmatprep.subr.bf16.mxu0 0
        %416 = vmatpush1.bf16.msra.mxu0 %v394
        %417 = vmatprep.subr.bf16.mxu0 0
        %418 = vmatpush1.bf16.msra.mxu0 %v395
        %419 = vmatprep.subr.bf16.mxu0 0
        %420 = vmatpush1.bf16.msra.mxu0 %v396
        %421 = vmatprep.subr.bf16.mxu0 0
        %422 = vmatpush1.bf16.msra.mxu0 0
        %423 = vmatprep.subr.bf16.mxu0 0
        %424 = vmatpush1.bf16.msra.mxu0 0
        %425 = vmatprep.subr.bf16.mxu0 0
        %426 = vmatpush1.bf16.msra.mxu0 0
        %427 = vmatprep.subr.bf16.mxu0 0
        %428 = vmatpush1.bf16.msra.mxu0 0
        %429 = vmatprep.subr.bf16.mxu0 0
        %430 = vmatpush1.bf16.msra.mxu0 0
        %431 = vmatprep.subr.bf16.mxu0 0
        %432 = vmatpush1.bf16.msra.mxu0 0
        %433 = vmatprep.subr.bf16.mxu0 0
        %434 = vmatpush1.bf16.msra.mxu0 0
        %435 = vmatprep.subr.bf16.mxu0 0
        %436 = vmatpush1.bf16.msra.mxu0 0
        %437 = vmatprep.mubr.bf16.mxu0 0
        %438 = vmatmul.mubr.bf16.gmra.mrb[0].mxu0 %v336
        %v439 = vpop.f32.mrb[0].mxu0
        %v440 = vadd.f32 %v356, %v439
        %v441 = vpop.f32.mrb[0].mxu0
        %v442 = vpop.f32.mrb[0].mxu0
        %v443 = vpop.f32.mrb[0].mxu0
        %444 = vdwg.mxu0
        %v445 = vmax.f32 %v440, 0.0
        %v446 = vpack.c.bf16 %v445, %v445
        %s447 = scalar_lea.vmem [#allocation4], 64
        %v448 = vld [vmem:[%s447] sm:$0xf]
        %v449 = vld [vmem:[%s447 + $0x4] sm:$0xf]
        %v450 = vld [vmem:[%s447 + $0x8] sm:$0xf]
        %v451 = vld [vmem:[%s447 + $0xc] sm:$0xf]
        %v452 = vld [vmem:[%s447 + $0x10] sm:$0xf]
        %v453 = vld [vmem:[%s447 + $0x14] sm:$0xf]
        %v454 = vld [vmem:[%s447 + $0x18] sm:$0xf]
        %v455 = vld [vmem:[%s447 + $0x1c] sm:$0xf]
        %v456 = vld [vmem:[%s447 + $0x20] sm:$0xf]
        %v457 = vld [vmem:[%s447 + $0x24] sm:$0xf]
        %v458 = vld [vmem:[%s447 + $0x28] sm:$0xf]
        %v459 = vld [vmem:[%s447 + $0x2c] sm:$0xf]
        %v460 = vld [vmem:[%s447 + $0x30] sm:$0xf]
        %v461 = vld [vmem:[%s447 + $0x34] sm:$0xf]
        %v462 = vld [vmem:[%s447 + $0x38] sm:$0xf]
        %v463 = vld [vmem:[%s447 + $0x3c] sm:$0xf]
        %v464 = vlaneseq
        %v465 = vshrl.u32 %v464, 7
        %v466 = vsub.s32 0, %v465
        %v467 = vrot.slane %v221, %v466
        %v484 = vunpack.c.l.b16 %v448
        %v485 = vunpack.c.l.b16 %v449
        %v486 = vunpack.c.l.b16 %v450
        %v487 = vunpack.c.l.b16 %v451
        %v488 = vunpack.c.l.b16 %v452
        %v489 = vunpack.c.l.b16 %v453
        %v490 = vunpack.c.l.b16 %v454
        %v491 = vunpack.c.l.b16 %v455
        %v492 = vunpack.c.l.b16 %v456
        %v493 = vunpack.c.l.b16 %v457
        %v494 = vunpack.c.l.b16 %v458
        %v495 = vunpack.c.l.b16 %v459
        %v496 = vunpack.c.l.b16 %v460
        %v497 = vunpack.c.l.b16 %v461
        %v498 = vunpack.c.l.b16 %v462
        %v499 = vunpack.c.l.b16 %v463
        %v500 = vpack.c.b16 %v485, %v484
        %v501 = vpack.c.b16 %v487, %v486
        %v502 = vpack.c.b16 %v489, %v488
        %v503 = vpack.c.b16 %v491, %v490
        %v504 = vpack.c.b16 %v493, %v492
        %v505 = vpack.c.b16 %v495, %v494
        %v506 = vpack.c.b16 %v497, %v496
        %v507 = vpack.c.b16 %v499, %v498
        %516 = vmatprep.subr.bf16.mxu0 0
        %517 = vmatpush1.bf16.msra.mxu0 %v500
        %518 = vmatprep.subr.bf16.mxu0 0
        %519 = vmatpush1.bf16.msra.mxu0 %v501
        %520 = vmatprep.subr.bf16.mxu0 0
        %521 = vmatpush1.bf16.msra.mxu0 %v502
        %522 = vmatprep.subr.bf16.mxu0 0
        %523 = vmatpush1.bf16.msra.mxu0 %v503
        %524 = vmatprep.subr.bf16.mxu0 0
        %525 = vmatpush1.bf16.msra.mxu0 %v504
        %526 = vmatprep.subr.bf16.mxu0 0
        %527 = vmatpush1.bf16.msra.mxu0 %v505
        %528 = vmatprep.subr.bf16.mxu0 0
        %529 = vmatpush1.bf16.msra.mxu0 %v506
        %530 = vmatprep.subr.bf16.mxu0 0
        %531 = vmatpush1.bf16.msra.mxu0 %v507
        %532 = vmatprep.subr.bf16.mxu0 0
        %533 = vmatpush1.bf16.msra.mxu0 0
        %534 = vmatprep.subr.bf16.mxu0 0
        %535 = vmatpush1.bf16.msra.mxu0 0
        %536 = vmatprep.subr.bf16.mxu0 0
        %537 = vmatpush1.bf16.msra.mxu0 0
        %538 = vmatprep.subr.bf16.mxu0 0
        %539 = vmatpush1.bf16.msra.mxu0 0
        %540 = vmatprep.subr.bf16.mxu0 0
        %541 = vmatpush1.bf16.msra.mxu0 0
        %542 = vmatprep.subr.bf16.mxu0 0
        %543 = vmatpush1.bf16.msra.mxu0 0
        %544 = vmatprep.subr.bf16.mxu0 0
        %545 = vmatpush1.bf16.msra.mxu0 0
        %546 = vmatprep.subr.bf16.mxu0 0
        %547 = vmatpush1.bf16.msra.mxu0 0
        %548 = vmatprep.mubr.bf16.mxu0 0
        %549 = vmatmul.mubr.bf16.gmra.mrb[0].mxu0 %v446
        %v550 = vpop.f32.mrb[0].mxu0
        %v551 = vadd.f32 %v467, %v550
        %v552 = vpop.f32.mrb[0].mxu0
        %v553 = vpop.f32.mrb[0].mxu0
        %v554 = vpop.f32.mrb[0].mxu0
        %555 = vdwg.mxu0
        %v556 = vtanh.pop %v551
        %557 = vst [vmem:[%s214] sm:$0xff] %v556
        %p558 = scmp.lt.s32.totalorder %s18, 3
        %s559 = scalar_select %p558, %s18, 3
        %s560 = smul.addr %s559, 8
        %s561 = scalar_lea.vmem %s3, %s560
        // Predicated region
        $region45: #{_forward_packed.1} parent=31 // pred_check
          %p562 = pneg %p104
        $region46: #{_forward_packed.1} parent=31 // pred_check_branch
          %564 = sbr.rel (%p562) target = $region48
        $region47: #{_forward_packed.1} parent=31 // pred_region
          _
        $region48: #{_forward_packed.1} parent=31 // pred_fallthru
          _
      $region32: #{_forward_packed.1} parent=5 // pred_fallthru
        _
      %p565 = scmp.le.s32.totalorder 2, %s13
      // Predicated region
      $region49: #{_forward_packed.1} parent=5 // pred_check
        %p566 = pneg %p565
      $region50: #{_forward_packed.1} parent=5 // pred_check_branch
        %568 = sbr.rel (%p566) target = $region52
      $region51: #{_forward_packed.1} parent=5 // pred_region
        %s569 = ssub.s32 %s13, 2
        // Predicated region
        $region53: #{_forward_packed.1} parent=51 // pred_check
          %p570 = pneg %p110
        $region54: #{_forward_packed.1} parent=51 // pred_check_branch
          %572 = sbr.rel (%p570) target = $region56
        $region55: #{_forward_packed.1} parent=51 // pred_region
          %p573 = scmp.lt.s32.totalorder %s19, 3
          %s574 = scalar_select %p573, %s19, 3
          %s575 = smul.addr %s574, 8
          %s576 = scalar_lea.vmem %s3, %s575
        $region56: #{_forward_packed.1} parent=51 // pred_fallthru
          _
      $region52: #{_forward_packed.1} parent=5 // pred_fallthru
        _
    $region6: #{_forward_packed.1} parent=1 // loop_footer
      %s17 = sadd.s32 1, %s13
    $region7: #{_forward_packed.1} parent=1 // loop_footer_branch
      %12 = sbr.rel target = $region3
    $region8: #{_forward_packed.1} parent=1 // loop_exit
      _
    %577 = vsyncpa [#allocation3], 1
    %s578 = scalar_lea.sflag [#allocation3], 1
    %579 = vsyncpa %s578, 1
    %580 = vsyncpa [#allocation5], 1

</llo_original>
